<compile_context>
chip_gen: v6e
topology: v6e:2x2x1
jax: 0.10.0
libtpu: 0.0.40
codegen_flags: <defaults>
</compile_context>

<pallas_src>
import functools
import math

import jax
import jax.numpy as jnp
from jax.experimental import pallas as pl
from jax.experimental.pallas import tpu as pltpu


# --------------------------------------------------------------------------
# helpers
# --------------------------------------------------------------------------
def _round_up(x: int, m: int) -> int:
    return (x + m - 1) // m * m


def _pick_tile(dim: int, pref: int, align: int) -> int:
    """Largest tile <= pref that divides dim and is a multiple of align."""
    if dim <= pref:
        return dim
    t = (pref // align) * align
    while t >= align:
        if dim % t == 0:
            return t
        t -= align
    return dim


def _vmem_capacity_bytes() -> int:
    try:
        return int(pltpu.get_tpu_info().vmem_capacity_bytes)
    except Exception:
        return 64 * 1024 * 1024  # conservative (v7x per-TensorCore)


# --------------------------------------------------------------------------
# parameter preparation (runs once at init — not on the forward path)
# --------------------------------------------------------------------------
def init_nonlinear_params(key, in_features, out_features):
    """Matches MyLinear.reset_parameters: uniform(-stdv, stdv), stdv=1/sqrt(out)."""
    kw, kb = jax.random.split(key)
    stdv = 1.0 / math.sqrt(out_features)
    w = jax.random.uniform(kw, (in_features, out_features), jnp.float32, -stdv, stdv)
    b = jax.random.uniform(kb, (out_features,), jnp.float32, -stdv, stdv)
    return w, b


def prepare_nonlinear_params(params, mxu_dtype=jnp.bfloat16, feature_align=128):
    """Pad feature dims to 128 lanes and cast W to the MXU operand dtype.

    Returns a list of (W_padded[mxu_dtype], b_padded[f32, shape (1, N_pad)]).
    """
    prepared = []
    for w, b in params:
        k, n = w.shape
        kp = _round_up(k, feature_align)
        np_ = _round_up(n, feature_align)
        w_p = jnp.pad(w, ((0, kp - k), (0, np_ - n))).astype(mxu_dtype)
        b_p = jnp.pad(b.reshape(1, n), ((0, 0), (0, np_ - n))).astype(jnp.float32)
        prepared.append((w_p, b_p))
    return prepared


# --------------------------------------------------------------------------
# fused kernel: whole layer stack, weights VMEM-resident, batch-tiled grid
# --------------------------------------------------------------------------
def _fused_stack_kernel(*refs, num_layers):
    """refs = (x_ref, w0, b0, w1, b1, ..., out_ref)."""
    x_ref = refs[0]
    out_ref = refs[-1]

    h = x_ref[...]                                   # f32 activations
    for i in range(num_layers):
        w_ref = refs[1 + 2 * i]
        b_ref = refs[2 + 2 * i]
        a = h.astype(w_ref.dtype)                    # bf16 (or f32) MXU operands
        acc = jnp.dot(a, w_ref[...], preferred_element_type=jnp.float32)
        h = jnp.maximum(acc + b_ref[...], 0.0)       # bias-add + ReLU in f32
    out_ref[...] = h.astype(out_ref.dtype)


# --------------------------------------------------------------------------
# fallback kernel: single layer, (M, N, K) grid, f32 accumulator scratch
# --------------------------------------------------------------------------
def _layer_kernel(x_ref, w_ref, b_ref, o_ref, acc_ref):
    k = pl.program_id(2)

    @pl.when(k == 0)
    def _():
        acc_ref[...] = jnp.zeros_like(acc_ref)

    acc_ref[...] += jnp.dot(x_ref[...].astype(w_ref.dtype), w_ref[...],
                            preferred_element_type=jnp.float32)

    @pl.when(k == pl.num_programs(2) - 1)
    def _():
        o_ref[...] = jnp.maximum(acc_ref[...] + b_ref[...], 0.0).astype(o_ref.dtype)


def _nonlinear_layer_tiled(h, w_p, b_p, *, tm, vmem_limit):
    """relu(h @ W + b) for one (padded) layer, W streamed in (TK, TN) tiles."""
    M, Kp = h.shape
    _, Np = w_p.shape
    tm = _pick_tile(M, tm, 8)
    tn = _pick_tile(Np, 256, 128)
    tk = _pick_tile(Kp, 512, 128)
    grid = (M // tm, Np // tn, Kp // tk)

    return pl.pallas_call(
        _layer_kernel,
        out_shape=jax.ShapeDtypeStruct((M, Np), jnp.float32),
        grid=grid,
        in_specs=[
            pl.BlockSpec((tm, tk), lambda i, j, k: (i, k)),
            pl.BlockSpec((tk, tn), lambda i, j, k: (k, j)),
            pl.BlockSpec((1, tn), lambda i, j, k: (0, j)),
        ],
        out_specs=pl.BlockSpec((tm, tn), lambda i, j, k: (i, j)),
        scratch_shapes=[pltpu.VMEM((tm, tn), jnp.float32)],
        compiler_params=pltpu.CompilerParams(
            dimension_semantics=("parallel", "parallel", "arbitrary"),
            vmem_limit_bytes=vmem_limit),
    )(h, w_p, b_p)


# --------------------------------------------------------------------------
# forward
# --------------------------------------------------------------------------
def fused_nonlinear_stack(x, padded_params, *, out_features,
                          tm_pref=256, force_fallback=False,
                          vmem_capacity_bytes=None):
    """relu(... relu(relu(x @ W0 + b0) @ W1 + b1) ...) with pre-padded params."""
    B, K0 = x.shape
    num_layers = len(padded_params)
    K0_pad = padded_params[0][0].shape[0]
    N_last_pad = padded_params[-1][0].shape[1]

    # Batch tile: 256-aligned for the 2x256^2 MXUs (v6e/v7x); small batches
    # collapse to one sublane-aligned tile.
    tm = min(tm_pref, _round_up(B, 8))
    B_pad = _round_up(B, tm)

    # Pad only the activations per call; K/N pads are baked into the params.
    x_p = jnp.pad(x, ((0, B_pad - B), (0, K0_pad - K0))).astype(jnp.float32)

    # ------------------------------------------------------------------
    # VMEM budget (re-derived per generation: 128 MiB v5e/v6e, 64 MiB v7x)
    # ------------------------------------------------------------------
    if vmem_capacity_bytes is None:
        vmem_capacity_bytes = _vmem_capacity_bytes()
    budget = int(0.75 * vmem_capacity_bytes)
    vmem_limit = int(min(budget, 100 * 1024 * 1024))

    weight_bytes = sum(int(w.size) * w.dtype.itemsize + int(b.size) * b.dtype.itemsize
                       for (w, b) in padded_params)
    max_feat = max([K0_pad] + [w.shape[1] for (w, _) in padded_params])
    fused_vmem_need = (2 * weight_bytes               # conservatively double-buffered
                       + 2 * tm * K0_pad * 4          # pipelined x tiles
                       + 2 * tm * N_last_pad * 4      # pipelined out tiles
                       + 2 * tm * max_feat * 4)       # live intermediate activations
    use_fused = (not force_fallback) and (fused_vmem_need <= budget)

    if use_fused:
        operands = [x_p]
        in_specs = [pl.BlockSpec((tm, K0_pad), lambda i: (i, 0))]
        flops = 0
        for (w_p, b_p) in padded_params:
            kp, np_ = w_p.shape
            operands += [w_p, b_p]
            # constant block index -> weights/bias stay VMEM-resident across tiles
            in_specs += [pl.BlockSpec((kp, np_), lambda i: (0, 0)),
                         pl.BlockSpec((1, np_), lambda i: (0, 0))]
            flops += 2 * B_pad * kp * np_
        bytes_accessed = (int(x_p.size) * 4 + weight_bytes + B_pad * N_last_pad * 4)

        out_p = pl.pallas_call(
            functools.partial(_fused_stack_kernel, num_layers=num_layers),
            out_shape=jax.ShapeDtypeStruct((B_pad, N_last_pad), jnp.float32),
            grid=(B_pad // tm,),
            in_specs=in_specs,
            out_specs=pl.BlockSpec((tm, N_last_pad), lambda i: (i, 0)),
            compiler_params=pltpu.CompilerParams(
                dimension_semantics=("parallel",),     # both TCs on v7x
                vmem_limit_bytes=vmem_limit),
            cost_estimate=pl.CostEstimate(
                flops=flops, transcendentals=0, bytes_accessed=bytes_accessed),
        )(*operands)
    else:
        # Per-layer K-tiled fallback: weights streamed, f32 VMEM accumulator.
        h = x_p
        for (w_p, b_p) in padded_params:
            h = _nonlinear_layer_tiled(h, w_p, b_p, tm=tm, vmem_limit=vmem_limit)
        out_p = h

    return out_p[:B, :out_features]


def nonlinear(x, w, b, mxu_dtype=jnp.float32):
    """Exact single-layer equivalent of the PyTorch NonLinear module."""
    prepped = prepare_nonlinear_params([(w, b)], mxu_dtype=mxu_dtype)
    return fused_nonlinear_stack(x, prepped, out_features=w.shape[1])


def nonlinear_reference(x, params):
    for w, b in params:
        x = jnp.maximum(x @ w + b, 0.0)
    return x


# --------------------------------------------------------------------------
# main
# --------------------------------------------------------------------------
if __name__ == "__main__":
    key = jax.random.PRNGKey(0)
    k_x, k0, k1, k2 = jax.random.split(key, 4)

    batch, in_features, hidden, out_features = 4, 16, 32, 8
    x = jax.random.normal(k_x, (batch, in_features), jnp.float32)

    params = [
        init_nonlinear_params(k0, in_features, hidden),
        init_nonlinear_params(k1, hidden, hidden),
        init_nonlinear_params(k2, hidden, out_features),
    ]
    ref1 = nonlinear_reference(x, params[:1])
    ref3 = nonlinear_reference(x, params)

    # --- 1) single NonLinear layer (f32 MXU operands -> exact match) ---
    w0, b0 = params[0]
    out1 = jax.block_until_ready(jax.jit(nonlinear)(x, w0, b0))
    assert out1.shape == (batch, hidden)
    assert jnp.allclose(out1, ref1, atol=1e-5, rtol=1e-5), "single layer mismatch"

    # --- 2) fused 3-layer stack, bf16 MXU operands / f32 accumulation ---
    prepped_bf16 = prepare_nonlinear_params(params, mxu_dtype=jnp.bfloat16)
    fwd_bf16 = jax.jit(functools.partial(
        fused_nonlinear_stack, out_features=out_features))
    out3 = jax.block_until_ready(fwd_bf16(x, prepped_bf16))
    assert out3.shape == (batch, out_features)
    assert jnp.allclose(out3, ref3, atol=5e-2, rtol=5e-2), "fused bf16 stack mismatch"

    # --- 3) fused 3-layer stack, f32 MXU operands (tight check) ---
    prepped_f32 = prepare_nonlinear_params(params, mxu_dtype=jnp.float32)
    fwd_f32 = jax.jit(functools.partial(
        fused_nonlinear_stack, out_features=out_features))
    out3_f32 = jax.block_until_ready(fwd_f32(x, prepped_f32))
    assert jnp.allclose(out3_f32, ref3, atol=1e-5, rtol=1e-5), "fused f32 stack mismatch"

    # --- 4) per-layer K-tiled fallback path (used when weights exceed VMEM) ---
    fwd_fb = jax.jit(functools.partial(
        fused_nonlinear_stack, out_features=out_features, force_fallback=True))
    out3_fb = jax.block_until_ready(fwd_fb(x, prepped_f32))
    assert jnp.allclose(out3_fb, ref3, atol=1e-5, rtol=1e-5), "fallback path mismatch"

    print("KERNEL_OK")
</pallas_src>

<mosaic_0001>
module attributes {stable_mosaic.version = 11 : i64} {
  func.func @_fused_stack_kernel(%arg0: i32, %arg1: memref<8x128xf32, #tpu.memory_space<vmem>>, %arg2: memref<128x128xf32, #tpu.memory_space<vmem>>, %arg3: memref<1x128xf32, #tpu.memory_space<vmem>>, %arg4: memref<8x128xf32, #tpu.memory_space<vmem>>) attributes {dimension_semantics = [#tpu.dimension_semantics<parallel>], iteration_bounds = array<i64: 1>, scalar_prefetch = 0 : i64, scratch_operands = 0 : i64, tpu.core_type = #tpu.core_type<tc>, window_params = [{transform_indices = @transform_0, window_bounds = array<i64: 8, 128>}, {pipeline_mode = #tpu.pipeline_mode<synchronous>, transform_indices = @transform_1, window_bounds = array<i64: 128, 128>}, {pipeline_mode = #tpu.pipeline_mode<synchronous>, transform_indices = @transform_2, window_bounds = array<i64: 1, 128>}, {transform_indices = @transform_3, window_bounds = array<i64: 8, 128>}]} {
    %c0 = arith.constant 0 : index
    %c0_0 = arith.constant 0 : index
    %0 = vector.load %arg1[%c0, %c0_0] : memref<8x128xf32, #tpu.memory_space<vmem>>, vector<8x128xf32>
    %c0_1 = arith.constant 0 : index
    %c0_2 = arith.constant 0 : index
    %1 = vector.load %arg2[%c0_1, %c0_2] : memref<128x128xf32, #tpu.memory_space<vmem>>, vector<128x128xf32>
    %cst = arith.constant dense<0.000000e+00> : vector<8x128xf32>
    %2 = tpu.matmul %0, %1, %cst {dimension_numbers = #tpu.dot_dimension_numbers<[1], [0], [0], [1], [0, 0, 1, 1], [], []>} : vector<8x128xf32>, vector<128x128xf32>, vector<8x128xf32> -> vector<8x128xf32>
    %c0_3 = arith.constant 0 : index
    %c0_4 = arith.constant 0 : index
    %3 = vector.load %arg3[%c0_3, %c0_4] : memref<1x128xf32, #tpu.memory_space<vmem>>, vector<1x128xf32>
    %4 = vector.broadcast %3 : vector<1x128xf32> to vector<8x128xf32>
    %5 = arith.addf %2, %4 : vector<8x128xf32>
    %cst_5 = arith.constant 0.000000e+00 : f32
    %6 = vector.broadcast %cst_5 : f32 to vector<8x128xf32>
    %7 = arith.maximumf %5, %6 : vector<8x128xf32>
    %c0_6 = arith.constant 0 : index
    %c0_7 = arith.constant 0 : index
    %8 = vector.load %arg4[%c0_6, %c0_7] : memref<8x128xf32, #tpu.memory_space<vmem>>, vector<8x128xf32>
    tpu.vector_store %arg4[%c0_6, %c0_7], %7 {strides = array<i32>} : memref<8x128xf32, #tpu.memory_space<vmem>>, vector<8x128xf32>,
    return
  }
  func.func @transform_0(%arg0: i32) -> (i32, i32) {
    %c0_i32 = arith.constant 0 : i32
    %c0_i32_0 = arith.constant 0 : i32
    return %arg0, %c0_i32 : i32, i32
  }
  func.func @transform_1(%arg0: i32) -> (i32, i32) {
    %c0_i32 = arith.constant 0 : i32
    %c0_i32_0 = arith.constant 0 : i32
    %c0_i32_1 = arith.constant 0 : i32
    return %c0_i32, %c0_i32_0 : i32, i32
  }
  func.func @transform_2(%arg0: i32) -> (i32, i32) {
    %c0_i32 = arith.constant 0 : i32
    %c0_i32_0 = arith.constant 0 : i32
    %c0_i32_1 = arith.constant 0 : i32
    return %c0_i32, %c0_i32_0 : i32, i32
  }
  func.func @transform_3(%arg0: i32) -> (i32, i32) {
    %c0_i32 = arith.constant 0 : i32
    %c0_i32_0 = arith.constant 0 : i32
    return %arg0, %c0_i32 : i32, i32
  }
}

</mosaic_0001>

<llo_original>
// kernel: nonlinear.1
$region0: #{nonlinear.1}
  #allocation0 [shape = 'u32[]', space=smem, size = 0x4, offset = 0x4, fixed_abs, tag = 'smem constant byte address 0x4 - core index']
  #allocation1 [shape = 'u32[144,128]{1,0:T(1,128)}', space=vmem, size = 0x12000, scoped, tag = 'internal scratch']
  %s0 = inlined_call_operand.vmem [shape: f32[8,128], index: 0, kind: input, shape index: {}]
  %s1 = inlined_call_operand.vmem [shape: f32[128,128], index: 1, kind: input, shape index: {}]
  %s2 = inlined_call_operand.vmem [shape: f32[1,128], index: 2, kind: input, shape index: {}]
  %s3 = inlined_call_operand.vmem [shape: f32[8,128], index: 3, kind: output, shape index: {}]
  %s4 = sld [smem:[#allocation0]]
  $region22: #{nonlinear.1} parent=0
    _
  %s6 = ssub.s32 1, %s4
  %s7 = scalar_select 0, %s6, %s4
  // Predicated region
  $region2: #{nonlinear.1} parent=0 // pred_check
    _
  $region3: #{nonlinear.1} parent=0 // pred_check_branch
    %9 = sbr.rel (0) target = $region5
  $region4: #{nonlinear.1} parent=0 // pred_region
    _
  $region5: #{nonlinear.1} parent=0 // pred_fallthru
    _
  // Predicated region
  $region6: #{nonlinear.1} parent=0 // pred_check
    _
  $region7: #{nonlinear.1} parent=0 // pred_check_branch
    %11 = sbr.rel (0) target = $region9
  $region8: #{nonlinear.1} parent=0 // pred_region
    _
  $region9: #{nonlinear.1} parent=0 // pred_fallthru
    _
  // Predicated region
  $region10: #{nonlinear.1} parent=0 // pred_check
    _
  $region11: #{nonlinear.1} parent=0 // pred_check_branch
    %13 = sbr.rel (0) target = $region13
  $region12: #{nonlinear.1} parent=0 // pred_region
    _
  $region13: #{nonlinear.1} parent=0 // pred_fallthru
    _
  %v14 = vld [vmem:[%s0] sm:$0xff]
  %v15 = vld [vmem:[%s1] sm:$0xff]
  %v16 = vld [vmem:[%s1 + $0x8] sm:$0xff]
  %v17 = vld [vmem:[%s1 + $0x10] sm:$0xff]
  %v18 = vld [vmem:[%s1 + $0x18] sm:$0xff]
  %v19 = vld [vmem:[%s1 + $0x20] sm:$0xff]
  %v20 = vld [vmem:[%s1 + $0x28] sm:$0xff]
  %v21 = vld [vmem:[%s1 + $0x30] sm:$0xff]
  %v22 = vld [vmem:[%s1 + $0x38] sm:$0xff]
  %v23 = vld [vmem:[%s1 + $0x40] sm:$0xff]
  %v24 = vld [vmem:[%s1 + $0x48] sm:$0xff]
  %v25 = vld [vmem:[%s1 + $0x50] sm:$0xff]
  %v26 = vld [vmem:[%s1 + $0x58] sm:$0xff]
  %v27 = vld [vmem:[%s1 + $0x60] sm:$0xff]
  %v28 = vld [vmem:[%s1 + $0x68] sm:$0xff]
  %v29 = vld [vmem:[%s1 + $0x70] sm:$0xff]
  %v30 = vld [vmem:[%s1 + $0x78] sm:$0xff]
  %v31 = vld [vmem:[%s2] sm:$0x1]
  %v33 = vlaneseq
  %v34 = vshrl.u32 %v33, 7
  %v35 = vsub.s32 0, %v34
  %v36 = vrot.slane %v31, %v35
  %38 = vmatprep.subr.mxu0 0.0
  %39 = vmatpush1.msra.mxu0 %v30
  %40 = vmatprep.subr.mxu0 0.0
  %41 = vmatpush1.msra.mxu0 %v29
  %42 = vmatprep.subr.mxu0 0.0
  %43 = vmatpush1.msra.mxu0 %v28
  %44 = vmatprep.subr.mxu0 0.0
  %45 = vmatpush1.msra.mxu0 %v27
  %46 = vmatprep.subr.mxu0 0.0
  %47 = vmatpush1.msra.mxu0 %v26
  %48 = vmatprep.subr.mxu0 0.0
  %49 = vmatpush1.msra.mxu0 %v25
  %50 = vmatprep.subr.mxu0 0.0
  %51 = vmatpush1.msra.mxu0 %v24
  %52 = vmatprep.subr.mxu0 0.0
  %53 = vmatpush1.msra.mxu0 %v23
  %54 = vmatprep.subr.mxu0 0.0
  %55 = vmatpush1.msra.mxu0 %v22
  %56 = vmatprep.subr.mxu0 0.0
  %57 = vmatpush1.msra.mxu0 %v21
  %58 = vmatprep.subr.mxu0 0.0
  %59 = vmatpush1.msra.mxu0 %v20
  %60 = vmatprep.subr.mxu0 0.0
  %61 = vmatpush1.msra.mxu0 %v19
  %62 = vmatprep.subr.mxu0 0.0
  %63 = vmatpush1.msra.mxu0 %v18
  %64 = vmatprep.subr.mxu0 0.0
  %65 = vmatpush1.msra.mxu0 %v17
  %66 = vmatprep.subr.mxu0 0.0
  %67 = vmatpush1.msra.mxu0 %v16
  %68 = vmatprep.subr.mxu0 0.0
  %69 = vmatpush1.msra.mxu0 %v15
  %70 = vmatprep.subr.mxu0 0.0
  %71 = vmatpush2.msra.mxu0 0.0
  %72 = vmatprep.subr.mxu0 0.0
  %73 = vmatpush2.msra.mxu0 0.0
  %74 = vmatprep.subr.mxu0 0.0
  %75 = vmatpush2.msra.mxu0 0.0
  %76 = vmatprep.subr.mxu0 0.0
  %77 = vmatpush2.msra.mxu0 0.0
  %78 = vmatprep.subr.mxu0 0.0
  %79 = vmatpush2.msra.mxu0 0.0
  %80 = vmatprep.subr.mxu0 0.0
  %81 = vmatpush2.msra.mxu0 0.0
  %82 = vmatprep.subr.mxu0 0.0
  %83 = vmatpush2.msra.mxu0 0.0
  %84 = vmatprep.subr.mxu0 0.0
  %85 = vmatpush2.msra.mxu0 0.0
  %86 = vmatprep.subr.mxu0 0.0
  %87 = vmatpush2.msra.mxu0 0.0
  %88 = vmatprep.subr.mxu0 0.0
  %89 = vmatpush2.msra.mxu0 0.0
  %90 = vmatprep.subr.mxu0 0.0
  %91 = vmatpush2.msra.mxu0 0.0
  %92 = vmatprep.subr.mxu0 0.0
  %93 = vmatpush2.msra.mxu0 0.0
  %94 = vmatprep.subr.mxu0 0.0
  %95 = vmatpush2.msra.mxu0 0.0
  %96 = vmatprep.subr.mxu0 0.0
  %97 = vmatpush2.msra.mxu0 0.0
  %98 = vmatprep.subr.mxu0 0.0
  %99 = vmatpush2.msra.mxu0 0.0
  %100 = vmatprep.subr.mxu0 0.0
  %101 = vmatpush2.msra.mxu0 0.0
  %102 = vmatprep.mubr.f32.mxu0 0.0
  %103 = vmatmul.mubr.f32.gmra.mxu0 %v14
  %v104 = vpop.f32.mrf.mxu0
  %v105 = vadd.f32 %v36, %v104
  %v106 = vpop.f32.mrf.mxu0
  %107 = vdwg.mxu0
  %v108 = vmax.f32 %v105, 0.0
  %109 = vst [vmem:[%s3] sm:$0xff] %v108
  // Predicated region
  $region14: #{nonlinear.1} parent=0 // pred_check
    _
  $region15: #{nonlinear.1} parent=0 // pred_check_branch
    %111 = sbr.rel (0) target = $region17
  $region16: #{nonlinear.1} parent=0 // pred_region
    _
  $region17: #{nonlinear.1} parent=0 // pred_fallthru
    _
  // Predicated region
  $region18: #{nonlinear.1} parent=0 // pred_check
    _
  $region19: #{nonlinear.1} parent=0 // pred_check_branch
    %113 = sbr.rel (0) target = $region21
  $region20: #{nonlinear.1} parent=0 // pred_region
    _
  $region21: #{nonlinear.1} parent=0 // pred_fallthru
    _

</llo_original>
